<compile_context>
chip_gen: v7x
topology: tpu7x:2x2x1
jax: 0.10.0
libtpu: 0.0.40
codegen_flags: <defaults>
</compile_context>

<pallas_src>
import jax
import jax.numpy as jnp
from jax.experimental import pallas as pl
from jax.experimental.pallas import tpu as pltpu

# ------------------------------- model constants -------------------------------

NUM_SCAN_SAMPLES = 64            # laser scan length (= state_size - 4)
STATE_SIZE = NUM_SCAN_SAMPLES + 4
ACTION_SIZE = 2
BATCH = 2

C1_OUT, K1, S1 = 32, 7, 3        # conv1: Conv1d(1, 32, kernel=7, stride=3)
C2_OUT, K2, S2 = 16, 3, 3        # conv2: Conv1d(32, 16, kernel=3, stride=3)


def conv1d_out_len(L, k, s):
    return (L - k) // s + 1


L1 = conv1d_out_len(NUM_SCAN_SAMPLES, K1, S1)   # 20
L2 = conv1d_out_len(L1, K2, S2)                 # 6
CONV_OUT = C2_OUT * L2                          # 96 = PyTorch Flatten(1,2) width
FC1_OUT = 124                                   # as declared in the source module


def _round_up(x, m):
    return ((x + m - 1) // m) * m


# Packed weight-slab layout (row offsets 8-aligned so in-kernel static slices
# never start mid sublane-tile; width = 640 = conv1 output width).
W_COLS = L1 * C1_OUT                                     # 640
W1_R0 = 0                                                # (68, 640)  conv1 Toeplitz (+4 zero rows)
W2_R0 = _round_up(W1_R0 + STATE_SIZE, 8)                 # 72  : (640, 96) conv2 blocks
F1C_R0 = _round_up(W2_R0 + L1 * C1_OUT, 8)               # 712 : (96, 124) fc1 conv part
F1O_R0 = _round_up(F1C_R0 + CONV_OUT, 8)                 # 808 : (68, 124) fc1 other part (+64 zero rows)
F2_R0 = _round_up(F1O_R0 + STATE_SIZE, 8)                # 880 : (124, 2)  fc2
F3_R0 = _round_up(F2_R0 + FC1_OUT, 8)                    # 1008: (2, 128)  fc3 (lane-padded)
W_ROWS = _round_up(F3_R0 + ACTION_SIZE, 8)               # 1016
BIAS_ROWS = 8                                            # rows: b1, b2, fc1_b, fc2_b, fc3_b
OUT_PAD = 128                                            # lane-dense output width
TB_DEFAULT = 256                                         # batch tile (rows per grid step)


# ----------------------------- fused Pallas kernel -----------------------------

def _actor_kernel(states_ref, w_ref, b_ref, out_ref):
    f32 = jnp.float32

    # conv1 + relu (im2col folded into the Toeplitz weight; the 4 extra
    # state lanes hit zero weight rows, so no in-kernel lane split is needed).
    w1 = w_ref[W1_R0:W1_R0 + STATE_SIZE, :]
    cdt = w1.dtype
    x = states_ref[...].astype(cdt)                                     # (TB, 68)
    c1 = jnp.maximum(
        jnp.dot(x, w1, preferred_element_type=f32) + b_ref[0:1, :], 0.0)

    # conv2 + relu (non-overlapping k==stride windows folded into the weight).
    # TODO(synk): if a post-batching profile ever shows the MXU slot binding on
    # v5e, replace this 85%-zero K=640 dot with L2 dense per-window dots.
    w2 = w_ref[W2_R0:W2_R0 + L1 * C1_OUT, :CONV_OUT]
    c3 = jnp.maximum(
        jnp.dot(c1.astype(cdt), w2, preferred_element_type=f32)
        + b_ref[1:2, :CONV_OUT], 0.0)

    # fc1 + relu (Flatten(1,2) permutation folded into the conv part; the
    # cat(other_states) becomes a second dot on the full state row).
    wf1c = w_ref[F1C_R0:F1C_R0 + CONV_OUT, :FC1_OUT]
    wf1o = w_ref[F1O_R0:F1O_R0 + STATE_SIZE, :FC1_OUT]
    x1 = jnp.maximum(
        jnp.dot(c3.astype(cdt), wf1c, preferred_element_type=f32)
        + jnp.dot(x, wf1o, preferred_element_type=f32)
        + b_ref[2:3, :FC1_OUT], 0.0)

    # fc2 + relu
    wf2 = w_ref[F2_R0:F2_R0 + FC1_OUT, :ACTION_SIZE]
    x2 = jnp.maximum(
        jnp.dot(x1.astype(cdt), wf2, preferred_element_type=f32)
        + b_ref[3:4, :ACTION_SIZE], 0.0)

    # fc3 + tanh, emitted as a lane-dense 128-wide slab (cols >= 2 are
    # tanh(0) == 0); the wrapper slices the first 2 lanes.
    wf3 = w_ref[F3_R0:F3_R0 + ACTION_SIZE, :OUT_PAD]
    out_ref[...] = jnp.tanh(
        jnp.dot(x2.astype(cdt), wf3, preferred_element_type=f32)
        + b_ref[4:5, :OUT_PAD])


def actor_forward(kparams, states, tb=TB_DEFAULT):
    B = states.shape[0]
    tb = int(min(tb, _round_up(B, 8)))
    b_pad = _round_up(B, tb)
    if b_pad != B:
        states = jnp.pad(states, ((0, b_pad - B), (0, 0)))
    grid = (b_pad // tb,)

    out = pl.pallas_call(
        _actor_kernel,
        out_shape=jax.ShapeDtypeStruct((b_pad, OUT_PAD), jnp.float32),
        grid_spec=pltpu.PrefetchScalarGridSpec(
            num_scalar_prefetch=0,
            grid=grid,
            in_specs=[
                pl.BlockSpec((tb, STATE_SIZE), lambda i: (i, 0)),
                # weight / bias slabs: same block every step -> VMEM-resident
                pl.BlockSpec((W_ROWS, W_COLS), lambda i: (0, 0)),
                pl.BlockSpec((BIAS_ROWS, W_COLS), lambda i: (0, 0)),
            ],
            out_specs=pl.BlockSpec((tb, OUT_PAD), lambda i: (i, 0)),
        ),
        compiler_params=pltpu.CompilerParams(
            dimension_semantics=("parallel",)),
    )(states, kparams["W"], kparams["B"])
    return out[:B, :ACTION_SIZE]


# ------------------------------ parameter handling ------------------------------

def init_params(key):
    """PyTorch-layout parameters, matching the original module's conventions."""
    ks = jax.random.split(key, 8)

    def uniform(k, shape, bound):
        return jax.random.uniform(k, shape, jnp.float32, -bound, bound)

    def xavier(k, shape):   # (out_features, in_features)
        bound = (6.0 / (shape[0] + shape[1])) ** 0.5
        return uniform(k, shape, bound)

    params = {}
    params["w1"] = uniform(ks[0], (C1_OUT, 1, K1), 1.0 / K1 ** 0.5)
    params["b1"] = uniform(ks[1], (C1_OUT,), 1.0 / K1 ** 0.5)
    params["w2"] = uniform(ks[2], (C2_OUT, C1_OUT, K2), 1.0 / (C1_OUT * K2) ** 0.5)
    params["b2"] = uniform(ks[3], (C2_OUT,), 1.0 / (C1_OUT * K2) ** 0.5)
    # TODO(synk): original declares fc1 = Linear(conv_out, 124) but feeds it
    # conv_out + 4 features (cat with other_states); use consistent in_features.
    params["fc1_w"] = xavier(ks[4], (FC1_OUT, CONV_OUT + 4))
    params["fc1_b"] = jnp.full((FC1_OUT,), 0.01, jnp.float32)
    # TODO(synk): original declares fc2 = Linear(128, action_size) but x1 has 124 features.
    params["fc2_w"] = xavier(ks[5], (ACTION_SIZE, FC1_OUT))
    params["fc2_b"] = jnp.full((ACTION_SIZE,), 0.01, jnp.float32)
    # TODO(synk): fc3 is used in forward() but never defined in the original __init__.
    params["fc3_w"] = xavier(ks[6], (ACTION_SIZE, ACTION_SIZE))
    params["fc3_b"] = jnp.full((ACTION_SIZE,), 0.01, jnp.float32)
    return params


def prepare_kernel_params(params, weight_dtype=jnp.bfloat16):
    """Fold im2col, conv2 windowing, Flatten(1,2), the concat split and all
    transposes into TWO constant slabs (one weight, one bias) ONCE, so the
    fused kernel is pure matmuls on static ref slices."""
    # conv1: c1[b, l*32 + c] = relu(sum_k state[b, 3l+k] * w1[c, 0, k] + b1[c])
    w1 = params["w1"][:, 0, :]                               # (32, 7)
    W1 = jnp.zeros((STATE_SIZE, L1 * C1_OUT), jnp.float32)   # rows 64:68 stay 0
    for l in range(L1):
        W1 = W1.at[S1 * l:S1 * l + K1, l * C1_OUT:(l + 1) * C1_OUT].set(w1.T)
    b1 = jnp.tile(params["b1"], L1)                          # (640,)

    # conv2: c3[b, l*16 + c] = relu(sum_{k,ci} c1[b, (3l+k)*32 + ci] * w2[c, ci, k] + b2[c])
    w2 = params["w2"]                                        # (16, 32, 3)
    W2 = jnp.zeros((L1 * C1_OUT, CONV_OUT), jnp.float32)
    for l in range(L2):
        for k in range(K2):
            r = (S2 * l + k) * C1_OUT
            W2 = W2.at[r:r + C1_OUT, l * C2_OUT:(l + 1) * C2_OUT].set(w2[:, :, k].T)
    b2 = jnp.tile(params["b2"], L2)                          # (96,)

    # fc1: permute conv columns from PyTorch Flatten(1,2) order (c*L2 + l) to
    # the kernel's time-major order (l*16 + c); the other_states part takes
    # the full 68-wide state row (rows 0:64 zero).
    fc1_w = params["fc1_w"]                                  # (124, CONV_OUT + 4)
    wc = fc1_w[:, :CONV_OUT].reshape(FC1_OUT, C2_OUT, L2)
    fc1_wc = jnp.transpose(wc, (2, 1, 0)).reshape(CONV_OUT, FC1_OUT)
    fc1_wo = jnp.zeros((STATE_SIZE, FC1_OUT), jnp.float32)
    fc1_wo = fc1_wo.at[NUM_SCAN_SAMPLES:, :].set(fc1_w[:, CONV_OUT:].T)

    fc2_w = params["fc2_w"].T                                # (124, 2)
    fc3_w = params["fc3_w"].T                                # (2, 2)

    W = jnp.zeros((W_ROWS, W_COLS), jnp.float32)
    W = W.at[W1_R0:W1_R0 + STATE_SIZE, :].set(W1)
    W = W.at[W2_R0:W2_R0 + L1 * C1_OUT, :CONV_OUT].set(W2)
    W = W.at[F1C_R0:F1C_R0 + CONV_OUT, :FC1_OUT].set(fc1_wc)
    W = W.at[F1O_R0:F1O_R0 + STATE_SIZE, :FC1_OUT].set(fc1_wo)
    W = W.at[F2_R0:F2_R0 + FC1_OUT, :ACTION_SIZE].set(fc2_w)
    W = W.at[F3_R0:F3_R0 + ACTION_SIZE, :ACTION_SIZE].set(fc3_w)   # lanes 2:128 stay 0

    Bb = jnp.zeros((BIAS_ROWS, W_COLS), jnp.float32)
    Bb = Bb.at[0, :].set(b1)
    Bb = Bb.at[1, :CONV_OUT].set(b2)
    Bb = Bb.at[2, :FC1_OUT].set(params["fc1_b"])
    Bb = Bb.at[3, :ACTION_SIZE].set(params["fc2_b"])
    Bb = Bb.at[4, :ACTION_SIZE].set(params["fc3_b"])

    return {"W": W.astype(weight_dtype), "B": Bb}


# --------------------------- pure-JAX checks (no Pallas) ---------------------------

def folded_forward(kparams, states):
    """Exactly the kernel's math on the folded slabs, in plain JAX (f32)."""
    W = kparams["W"].astype(jnp.float32)
    Bb = kparams["B"]
    x = states
    c1 = jax.nn.relu(x @ W[W1_R0:W1_R0 + STATE_SIZE, :] + Bb[0:1, :])
    c3 = jax.nn.relu(c1 @ W[W2_R0:W2_R0 + L1 * C1_OUT, :CONV_OUT] + Bb[1:2, :CONV_OUT])
    x1 = jax.nn.relu(c3 @ W[F1C_R0:F1C_R0 + CONV_OUT, :FC1_OUT]
                     + x @ W[F1O_R0:F1O_R0 + STATE_SIZE, :FC1_OUT]
                     + Bb[2:3, :FC1_OUT])
    x2 = jax.nn.relu(x1 @ W[F2_R0:F2_R0 + FC1_OUT, :ACTION_SIZE] + Bb[3:4, :ACTION_SIZE])
    return jnp.tanh(x2 @ W[F3_R0:F3_R0 + ACTION_SIZE, :ACTION_SIZE] + Bb[4:5, :ACTION_SIZE])


def reference_forward(params, states):
    """f32 reference mirroring the PyTorch forward (conv via explicit im2col)."""
    B = states.shape[0]
    laser = states[:, :NUM_SCAN_SAMPLES]
    other = states[:, NUM_SCAN_SAMPLES:NUM_SCAN_SAMPLES + 4]
    idx1 = jnp.arange(L1)[:, None] * S1 + jnp.arange(K1)[None, :]
    p1 = laser[:, idx1]                                           # (B, L1, 7)
    c1 = jax.nn.relu(jnp.einsum('blk,ck->bcl', p1, params["w1"][:, 0, :])
                     + params["b1"][None, :, None])               # (B, 32, L1)
    idx2 = jnp.arange(L2)[:, None] * S2 + jnp.arange(K2)[None, :]
    p2 = c1[:, :, idx2]                                           # (B, 32, L2, 3)
    c3 = jax.nn.relu(jnp.einsum('bilk,cik->bcl', p2, params["w2"])
                     + params["b2"][None, :, None])               # (B, 16, L2)
    combined = jnp.concatenate([c3.reshape(B, CONV_OUT), other], axis=1)
    x1 = jax.nn.relu(combined @ params["fc1_w"].T + params["fc1_b"])
    x2 = jax.nn.relu(x1 @ params["fc2_w"].T + params["fc2_b"])
    return jnp.tanh(x2 @ params["fc3_w"].T + params["fc3_b"])


if __name__ == "__main__":
    key = jax.random.PRNGKey(0)
    pkey, xkey = jax.random.split(key)
    params = init_params(pkey)
    states = jax.random.normal(xkey, (BATCH, STATE_SIZE), dtype=jnp.float32)

    # 1) Validate the constant folding exactly (f32, tight tolerance, no Pallas).
    kparams_f32 = prepare_kernel_params(params, weight_dtype=jnp.float32)
    with jax.default_matmul_precision("highest"):
        ref = reference_forward(params, states)
        folded = folded_forward(kparams_f32, states)
    assert bool(jnp.allclose(folded, ref, atol=1e-5, rtol=1e-5)), (folded, ref)

    # 2) Run the fused, batched Pallas kernel (bf16 MXU operands, f32 accumulate).
    kparams = prepare_kernel_params(params, weight_dtype=jnp.bfloat16)
    fwd = jax.jit(actor_forward)
    action = fwd(kparams, states)      # B=2 -> padded to one 8-row tile, grid=(1,)
    jax.block_until_ready(action)

    assert action.shape == (BATCH, ACTION_SIZE) and action.dtype == jnp.float32
    # loose tolerance only because of bf16 matmul operands; structure was
    # verified exactly by the f32 folded-forward check above.
    assert bool(jnp.allclose(action, ref, atol=0.1, rtol=0.1)), (action, ref)
    print("KERNEL_OK")
</pallas_src>

<mosaic_0001>
module attributes {stable_mosaic.version = 11 : i64} {
  func.func @_actor_kernel(%arg0: i32, %arg1: memref<8x68xf32, #tpu.memory_space<vmem>>, %arg2: memref<1016x640xbf16, #tpu.memory_space<vmem>>, %arg3: memref<8x640xf32, #tpu.memory_space<vmem>>, %arg4: memref<8x128xf32, #tpu.memory_space<vmem>>) attributes {dimension_semantics = [#tpu.dimension_semantics<parallel>], iteration_bounds = array<i64: 1>, scalar_prefetch = 0 : i64, scratch_operands = 0 : i64, tpu.core_type = #tpu.core_type<tc>, window_params = [{transform_indices = @transform_0, window_bounds = array<i64: 8, 68>}, {pipeline_mode = #tpu.pipeline_mode<synchronous>, transform_indices = @transform_1, window_bounds = array<i64: 1016, 640>}, {pipeline_mode = #tpu.pipeline_mode<synchronous>, transform_indices = @transform_2, window_bounds = array<i64: 8, 640>}, {transform_indices = @transform_3, window_bounds = array<i64: 8, 128>}]} {
    %c0 = arith.constant 0 : index
    %c0_0 = arith.constant 0 : index
    %0 = vector.load %arg2[%c0, %c0_0] : memref<1016x640xbf16, #tpu.memory_space<vmem>>, vector<68x640xbf16>
    %c0_1 = arith.constant 0 : index
    %c0_2 = arith.constant 0 : index
    %1 = vector.load %arg1[%c0_1, %c0_2] : memref<8x68xf32, #tpu.memory_space<vmem>>, vector<8x68xf32>
    %2 = arith.truncf %1 : vector<8x68xf32> to vector<8x68xbf16>
    %cst = arith.constant dense<0.000000e+00> : vector<8x640xf32>
    %3 = tpu.matmul %2, %0, %cst {dimension_numbers = #tpu.dot_dimension_numbers<[1], [0], [0], [1], [0, 0, 1, 1], [], []>} : vector<8x68xbf16>, vector<68x640xbf16>, vector<8x640xf32> -> vector<8x640xf32>
    %c0_3 = arith.constant 0 : index
    %c0_4 = arith.constant 0 : index
    %4 = vector.load %arg3[%c0_3, %c0_4] : memref<8x640xf32, #tpu.memory_space<vmem>>, vector<1x640xf32>
    %5 = vector.broadcast %4 : vector<1x640xf32> to vector<8x640xf32>
    %6 = arith.addf %3, %5 : vector<8x640xf32>
    %cst_5 = arith.constant 0.000000e+00 : f32
    %7 = vector.broadcast %cst_5 : f32 to vector<8x640xf32>
    %8 = arith.maximumf %6, %7 : vector<8x640xf32>
    %c72 = arith.constant 72 : index
    %c0_6 = arith.constant 0 : index
    %9 = vector.load %arg2[%c72, %c0_6] : memref<1016x640xbf16, #tpu.memory_space<vmem>>, vector<640x96xbf16>
    %10 = arith.truncf %8 : vector<8x640xf32> to vector<8x640xbf16>
    %cst_7 = arith.constant dense<0.000000e+00> : vector<8x96xf32>
    %11 = tpu.matmul %10, %9, %cst_7 {dimension_numbers = #tpu.dot_dimension_numbers<[1], [0], [0], [1], [0, 0, 1, 1], [], []>} : vector<8x640xbf16>, vector<640x96xbf16>, vector<8x96xf32> -> vector<8x96xf32>
    %c1 = arith.constant 1 : index
    %c0_8 = arith.constant 0 : index
    %12 = vector.load %arg3[%c1, %c0_8] : memref<8x640xf32, #tpu.memory_space<vmem>>, vector<1x96xf32>
    %13 = vector.broadcast %12 : vector<1x96xf32> to vector<8x96xf32>
    %14 = arith.addf %11, %13 : vector<8x96xf32>
    %cst_9 = arith.constant 0.000000e+00 : f32
    %15 = vector.broadcast %cst_9 : f32 to vector<8x96xf32>
    %16 = arith.maximumf %14, %15 : vector<8x96xf32>
    %c712 = arith.constant 712 : index
    %c0_10 = arith.constant 0 : index
    %17 = vector.load %arg2[%c712, %c0_10] : memref<1016x640xbf16, #tpu.memory_space<vmem>>, vector<96x124xbf16>
    %c808 = arith.constant 808 : index
    %c0_11 = arith.constant 0 : index
    %18 = vector.load %arg2[%c808, %c0_11] : memref<1016x640xbf16, #tpu.memory_space<vmem>>, vector<68x124xbf16>
    %19 = arith.truncf %16 : vector<8x96xf32> to vector<8x96xbf16>
    %cst_12 = arith.constant dense<0.000000e+00> : vector<8x124xf32>
    %20 = tpu.matmul %19, %17, %cst_12 {dimension_numbers = #tpu.dot_dimension_numbers<[1], [0], [0], [1], [0, 0, 1, 1], [], []>} : vector<8x96xbf16>, vector<96x124xbf16>, vector<8x124xf32> -> vector<8x124xf32>
    %cst_13 = arith.constant dense<0.000000e+00> : vector<8x124xf32>
    %21 = tpu.matmul %2, %18, %cst_13 {dimension_numbers = #tpu.dot_dimension_numbers<[1], [0], [0], [1], [0, 0, 1, 1], [], []>} : vector<8x68xbf16>, vector<68x124xbf16>, vector<8x124xf32> -> vector<8x124xf32>
    %22 = arith.addf %20, %21 : vector<8x124xf32>
    %c2 = arith.constant 2 : index
    %c0_14 = arith.constant 0 : index
    %23 = vector.load %arg3[%c2, %c0_14] : memref<8x640xf32, #tpu.memory_space<vmem>>, vector<1x124xf32>
    %24 = vector.broadcast %23 : vector<1x124xf32> to vector<8x124xf32>
    %25 = arith.addf %22, %24 : vector<8x124xf32>
    %cst_15 = arith.constant 0.000000e+00 : f32
    %26 = vector.broadcast %cst_15 : f32 to vector<8x124xf32>
    %27 = arith.maximumf %25, %26 : vector<8x124xf32>
    %c880 = arith.constant 880 : index
    %c0_16 = arith.constant 0 : index
    %28 = vector.load %arg2[%c880, %c0_16] : memref<1016x640xbf16, #tpu.memory_space<vmem>>, vector<124x2xbf16>
    %29 = arith.truncf %27 : vector<8x124xf32> to vector<8x124xbf16>
    %cst_17 = arith.constant dense<0.000000e+00> : vector<8x2xf32>
    %30 = tpu.matmul %29, %28, %cst_17 {dimension_numbers = #tpu.dot_dimension_numbers<[1], [0], [0], [1], [0, 0, 1, 1], [], []>} : vector<8x124xbf16>, vector<124x2xbf16>, vector<8x2xf32> -> vector<8x2xf32>
    %c3 = arith.constant 3 : index
    %c0_18 = arith.constant 0 : index
    %31 = vector.load %arg3[%c3, %c0_18] : memref<8x640xf32, #tpu.memory_space<vmem>>, vector<1x2xf32>
    %32 = vector.broadcast %31 : vector<1x2xf32> to vector<8x2xf32>
    %33 = arith.addf %30, %32 : vector<8x2xf32>
    %cst_19 = arith.constant 0.000000e+00 : f32
    %34 = vector.broadcast %cst_19 : f32 to vector<8x2xf32>
    %35 = arith.maximumf %33, %34 : vector<8x2xf32>
    %c1008 = arith.constant 1008 : index
    %c0_20 = arith.constant 0 : index
    %36 = vector.load %arg2[%c1008, %c0_20] : memref<1016x640xbf16, #tpu.memory_space<vmem>>, vector<2x128xbf16>
    %37 = arith.truncf %35 : vector<8x2xf32> to vector<8x2xbf16>
    %cst_21 = arith.constant dense<0.000000e+00> : vector<8x128xf32>
    %38 = tpu.matmul %37, %36, %cst_21 {dimension_numbers = #tpu.dot_dimension_numbers<[1], [0], [0], [1], [0, 0, 1, 1], [], []>} : vector<8x2xbf16>, vector<2x128xbf16>, vector<8x128xf32> -> vector<8x128xf32>
    %c4 = arith.constant 4 : index
    %c0_22 = arith.constant 0 : index
    %39 = vector.load %arg3[%c4, %c0_22] : memref<8x640xf32, #tpu.memory_space<vmem>>, vector<1x128xf32>
    %40 = vector.broadcast %39 : vector<1x128xf32> to vector<8x128xf32>
    %41 = arith.addf %38, %40 : vector<8x128xf32>
    %42 = math.tanh %41 : vector<8x128xf32>
    %c0_23 = arith.constant 0 : index
    %c0_24 = arith.constant 0 : index
    %43 = vector.load %arg4[%c0_23, %c0_24] : memref<8x128xf32, #tpu.memory_space<vmem>>, vector<8x128xf32>
    tpu.vector_store %arg4[%c0_23, %c0_24], %42 {strides = array<i32>} : memref<8x128xf32, #tpu.memory_space<vmem>>, vector<8x128xf32>,
    return
  }
  func.func @transform_0(%arg0: i32) -> (i32, i32) {
    %c0_i32 = arith.constant 0 : i32
    %c0_i32_0 = arith.constant 0 : i32
    return %arg0, %c0_i32 : i32, i32
  }
  func.func @transform_1(%arg0: i32) -> (i32, i32) {
    %c0_i32 = arith.constant 0 : i32
    %c0_i32_0 = arith.constant 0 : i32
    %c0_i32_1 = arith.constant 0 : i32
    return %c0_i32, %c0_i32_0 : i32, i32
  }
  func.func @transform_2(%arg0: i32) -> (i32, i32) {
    %c0_i32 = arith.constant 0 : i32
    %c0_i32_0 = arith.constant 0 : i32
    %c0_i32_1 = arith.constant 0 : i32
    return %c0_i32, %c0_i32_0 : i32, i32
  }
  func.func @transform_3(%arg0: i32) -> (i32, i32) {
    %c0_i32 = arith.constant 0 : i32
    %c0_i32_0 = arith.constant 0 : i32
    return %arg0, %c0_i32 : i32, i32
  }
}

</mosaic_0001>

<llo_original>
// kernel: actor_forward.1
$region0: #{actor_forward.1}
  #allocation0 [shape = 'u32[]', space=smem, size = 0x4, offset = 0x4, fixed_abs, tag = 'smem constant byte address 0x4 - core index']
  #allocation1 [shape = 'u32[144,128]{1,0:T(1,128)}', space=vmem, size = 0x12000, scoped, tag = 'internal scratch']
  %s0 = inlined_call_operand.vmem [shape: f32[8,68], index: 0, kind: input, shape index: {}]
  %s1 = inlined_call_operand.hbm [shape: bf16[1016,640], index: 1, kind: input, shape index: {}]
  %s2 = inlined_call_operand.hbm [shape: f32[8,640], index: 2, kind: input, shape index: {}]
  %s3 = inlined_call_operand.vmem [shape: f32[8,128], index: 3, kind: output, shape index: {}]
  %s4 = sld [smem:[#allocation0]]
  $region30: #{actor_forward.1} parent=0
    _
  %s6 = ssub.s32 1, %s4
  %s7 = scalar_select 0, %s6, %s4
  $region1: #{actor_forward.1} parent=0
    #allocation2 [shape = 'u8[1300480]{0}', space=vmem, size = 0x13d800, scoped, tag = 'input window, operand 1, single buffered']
    #allocation3 [shape = 's32[1]{0}', space=sflag, size = 0x4, scoped, tag = 'scoped memory for actor_forward.1']
    #allocation4 [shape = 'u8[20480]{0}', space=vmem, size = 0x5000, scoped, tag = 'input window, operand 2, single buffered']
    #allocation5 [shape = 's32[1]{0}', space=sflag, size = 0x4, scoped, tag = 'scoped memory for actor_forward.1']
    %8 = vsyncpa [#allocation3], 0
    %9 = vsyncpa [#allocation5], 0
    // Predicated region
    $region2: #{actor_forward.1} parent=1 // pred_check
      _
    $region3: #{actor_forward.1} parent=1 // pred_check_branch
      %11 = sbr.rel (0) target = $region5
    $region4: #{actor_forward.1} parent=1 // pred_region
      _
    $region5: #{actor_forward.1} parent=1 // pred_fallthru
      _
    // Predicated region
    $region6: #{actor_forward.1} parent=1 // pred_check
      _
    $region7: #{actor_forward.1} parent=1 // pred_check_branch
      %13 = sbr.rel (0) target = $region9
    $region8: #{actor_forward.1} parent=1 // pred_region
      %s15 = ssub.s32 40640, 40640
      %16 = vsyncadd [#allocation3], %s15
      %s17 = sshll.u32 [#allocation2], 4
      %s18 = int_to_ptr.vmem [resolvable:$true] %s17
      %23 = dma.hbm_to_vmem [thread:$0]  %s1, 40640, %s18, [#allocation3], 320, 320, 20
    $region9: #{actor_forward.1} parent=1 // pred_fallthru
      _
    // Predicated region
    $region10: #{actor_forward.1} parent=1 // pred_check
      _
    $region11: #{actor_forward.1} parent=1 // pred_check_branch
      %25 = sbr.rel (0) target = $region13
    $region12: #{actor_forward.1} parent=1 // pred_region
      %s27 = ssub.s32 640, 640
      %28 = vsyncadd [#allocation5], %s27
      %s30 = sshll.u32 [#allocation4], 4
      %s31 = int_to_ptr.vmem [resolvable:$true] %s30
      %33 = dma.hbm_to_vmem [thread:$0]  %s2, 640, %s31, [#allocation5]
    $region13: #{actor_forward.1} parent=1 // pred_fallthru
      _
    // Predicated region
    $region14: #{actor_forward.1} parent=1 // pred_check
      _
    $region15: #{actor_forward.1} parent=1 // pred_check_branch
      %35 = sbr.rel (0) target = $region17
    $region16: #{actor_forward.1} parent=1 // pred_region
      %36 = dma.done [#allocation3], 40640
    $region17: #{actor_forward.1} parent=1 // pred_fallthru
      _
    // Predicated region
    $region18: #{actor_forward.1} parent=1 // pred_check
      _
    $region19: #{actor_forward.1} parent=1 // pred_check_branch
      %38 = sbr.rel (0) target = $region21
    $region20: #{actor_forward.1} parent=1 // pred_region
      %39 = dma.done [#allocation5], 640
    $region21: #{actor_forward.1} parent=1 // pred_fallthru
      _
    %v41 = vld [vmem:[#allocation2] sm:$0xff]
    %v42 = vld [vmem:[#allocation2 + $0x8] sm:$0xff]
    %v43 = vld [vmem:[#allocation2 + $0x10] sm:$0xf]
    %v44 = vld [vmem:[#allocation2 + $0x14] sm:$0xff]
    %v45 = vld [vmem:[#allocation2 + $0x1c] sm:$0xff]
    %v46 = vld [vmem:[#allocation2 + $0x24] sm:$0xf]
    %v47 = vld [vmem:[#allocation2 + $0x28] sm:$0xff]
    %v48 = vld [vmem:[#allocation2 + $0x30] sm:$0xff]
    %v49 = vld [vmem:[#allocation2 + $0x38] sm:$0xf]
    %v50 = vld [vmem:[#allocation2 + $0x3c] sm:$0xff]
    %v51 = vld [vmem:[#allocation2 + $0x44] sm:$0xff]
    %v52 = vld [vmem:[#allocation2 + $0x4c] sm:$0xf]
    %v53 = vld [vmem:[#allocation2 + $0x50] sm:$0xff]
    %v54 = vld [vmem:[#allocation2 + $0x58] sm:$0xff]
    %v55 = vld [vmem:[#allocation2 + $0x60] sm:$0xf]
    %v56 = vld [vmem:[#allocation2 + $0x64] sm:$0xff]
    %v57 = vld [vmem:[#allocation2 + $0x6c] sm:$0xff]
    %v58 = vld [vmem:[#allocation2 + $0x74] sm:$0xf]
    %v59 = vld [vmem:[#allocation2 + $0x78] sm:$0xff]
    %v60 = vld [vmem:[#allocation2 + $0x80] sm:$0xff]
    %v61 = vld [vmem:[#allocation2 + $0x88] sm:$0xf]
    %v62 = vld [vmem:[#allocation2 + $0x8c] sm:$0xff]
    %v63 = vld [vmem:[#allocation2 + $0x94] sm:$0xff]
    %v64 = vld [vmem:[#allocation2 + $0x9c] sm:$0xf]
    %v65 = vld [vmem:[#allocation2 + $0xa0] sm:$0x33]
    %v66 = vld [vmem:[#allocation2 + $0xa8] sm:$0x33]
    %v67 = vld [vmem:[#allocation2 + $0xb0] sm:$0x3]
    %v68 = vld [vmem:[%s0] sm:$0xff]
    %v69 = vpack.c.bf16 %v68, %v68
    %v70 = vld [vmem:[#allocation4] ss:$8 sm:$0xf]
    %v71 = vld [vmem:[#allocation4] ss:$8 sm:$0x10]
    %v72 = vor.u32 %v70, %v71
    %v74 = vlaneseq
    %v75 = vshrl.u32 %v74, 7
    %v76 = vsub.s32 0, %v75
    %v77 = vrot.slane %v72, %v76
    %v78 = vlaneseq
    %v79 = vshrl.u32 %v78, 7
    %v80 = vsub.s32 1, %v79
    %v81 = vrot.slane %v72, %v80
    %v82 = vlaneseq
    %v83 = vshrl.u32 %v82, 7
    %v84 = vsub.s32 2, %v83
    %v85 = vrot.slane %v72, %v84
    %v86 = vlaneseq
    %v87 = vshrl.u32 %v86, 7
    %v88 = vsub.s32 3, %v87
    %v89 = vrot.slane %v72, %v88
    %v90 = vlaneseq
    %v91 = vshrl.u32 %v90, 7
    %v92 = vsub.s32 4, %v91
    %v93 = vrot.slane %v72, %v92
    %v126 = vunpack.c.l.b16 %v41
    %v127 = vunpack.c.h.b16 %v41
    %v128 = vunpack.c.l.b16 %v42
    %v129 = vunpack.c.h.b16 %v42
    %v130 = vunpack.c.l.b16 %v43
    %v131 = vunpack.c.l.b16 %v44
    %v132 = vunpack.c.h.b16 %v44
    %v133 = vunpack.c.l.b16 %v45
    %v134 = vunpack.c.h.b16 %v45
    %v135 = vunpack.c.l.b16 %v46
    %v136 = vunpack.c.l.b16 %v47
    %v137 = vunpack.c.h.b16 %v47
    %v138 = vunpack.c.l.b16 %v48
    %v139 = vunpack.c.h.b16 %v48
    %v140 = vunpack.c.l.b16 %v49
    %v141 = vunpack.c.l.b16 %v50
    %v142 = vunpack.c.h.b16 %v50
    %v143 = vunpack.c.l.b16 %v51
    %v144 = vunpack.c.h.b16 %v51
    %v145 = vunpack.c.l.b16 %v52
    %v146 = vunpack.c.l.b16 %v53
    %v147 = vunpack.c.h.b16 %v53
    %v148 = vunpack.c.l.b16 %v54
    %v149 = vunpack.c.h.b16 %v54
    %v150 = vunpack.c.l.b16 %v55
    %v151 = vunpack.c.l.b16 %v56
    %v152 = vunpack.c.h.b16 %v56
    %v153 = vunpack.c.l.b16 %v57
    %v154 = vunpack.c.h.b16 %v57
    %v155 = vunpack.c.l.b16 %v58
    %v156 = vunpack.c.l.b16 %v59
    %v157 = vunpack.c.h.b16 %v59
    %v158 = vunpack.c.l.b16 %v60
    %v159 = vunpack.c.h.b16 %v60
    %v160 = vunpack.c.l.b16 %v61
    %v161 = vunpack.c.l.b16 %v62
    %v162 = vunpack.c.h.b16 %v62
    %v163 = vunpack.c.l.b16 %v63
    %v164 = vunpack.c.h.b16 %v63
    %v165 = vunpack.c.l.b16 %v64
    %v166 = vunpack.c.l.b16 %v65
    %v167 = vunpack.c.h.b16 %v65
    %v168 = vunpack.c.l.b16 %v66
    %v169 = vunpack.c.h.b16 %v66
    %v170 = vunpack.c.l.b16 %v67
    %v171 = vpack.c.b16 %v131, %v126
    %v172 = vpack.c.b16 %v132, %v127
    %v173 = vpack.c.b16 %v133, %v128
    %v174 = vpack.c.b16 %v134, %v129
    %v175 = vpack.c.b16 %v135, %v130
    %v176 = vpack.c.b16 %v141, %v136
    %v177 = vpack.c.b16 %v142, %v137
    %v178 = vpack.c.b16 %v143, %v138
    %v179 = vpack.c.b16 %v144, %v139
    %v180 = vpack.c.b16 %v145, %v140
    %v181 = vpack.c.b16 %v151, %v146
    %v182 = vpack.c.b16 %v152, %v147
    %v183 = vpack.c.b16 %v153, %v148
    %v184 = vpack.c.b16 %v154, %v149
    %v185 = vpack.c.b16 %v155, %v150
    %v186 = vpack.c.b16 %v161, %v156
    %v187 = vpack.c.b16 %v162, %v157
    %v188 = vpack.c.b16 %v163, %v158
    %v189 = vpack.c.b16 %v164, %v159
    %v190 = vpack.c.b16 %v165, %v160
    %v191 = vpack.c.b16 %v166, %v166
    %v192 = vpack.c.b16 %v167, %v167
    %v193 = vpack.c.b16 %v168, %v168
    %v194 = vpack.c.b16 %v169, %v169
    %v195 = vpack.c.b16 %v170, %v170
    %vm216 = vcmask 556032
    %v218 = vsel %vm216, %v69, 0
    %vm220 = vcmask 1041408
    %v222 = vsel %vm220, %v191, 0
    %v225 = vsel %vm220, %v192, 0
    %v228 = vsel %vm220, %v193, 0
    %v231 = vsel %vm220, %v194, 0
    %v234 = vsel %vm220, %v195, 0
    %236 = vmatprep.subr.bf16.mxu0 %v172
    %237 = vmatpush1.bf16.msra.mxu0 %v171
    %238 = vmatprep.subr.bf16.mxu0 %v177
    %239 = vmatpush1.bf16.msra.mxu0 %v176
    %240 = vmatprep.subr.bf16.mxu0 %v182
    %241 = vmatpush1.bf16.msra.mxu0 %v181
    %242 = vmatprep.subr.bf16.mxu0 %v187
    %243 = vmatpush1.bf16.msra.mxu0 %v186
    %244 = vmatprep.subr.bf16.mxu0 %v225
    %245 = vmatpush1.bf16.msra.mxu0 %v222
    %246 = vmatprep.subr.bf16.mxu0 0
    %247 = vmatpush1.bf16.msra.mxu0 0
    %248 = vmatprep.subr.bf16.mxu0 0
    %249 = vmatpush1.bf16.msra.mxu0 0
    %250 = vmatprep.subr.bf16.mxu0 0
    %251 = vmatpush1.bf16.msra.mxu0 0
    %252 = vmatprep.subr.bf16.mxu0 0
    %253 = vmatpush1.bf16.msra.mxu0 0
    %254 = vmatprep.subr.bf16.mxu0 0
    %255 = vmatpush1.bf16.msra.mxu0 0
    %256 = vmatprep.subr.bf16.mxu0 0
    %257 = vmatpush1.bf16.msra.mxu0 0
    %258 = vmatprep.subr.bf16.mxu0 0
    %259 = vmatpush1.bf16.msra.mxu0 0
    %260 = vmatprep.subr.bf16.mxu0 0
    %261 = vmatpush1.bf16.msra.mxu0 0
    %262 = vmatprep.subr.bf16.mxu0 0
    %263 = vmatpush1.bf16.msra.mxu0 0
    %264 = vmatprep.subr.bf16.mxu0 0
    %265 = vmatpush1.bf16.msra.mxu0 0
    %266 = vmatprep.subr.bf16.mxu0 0
    %267 = vmatpush1.bf16.msra.mxu0 0
    %268 = vmatprep.mubr.bf16.mxu0 0
    %269 = vmatmul.mubr.bf16.gmra.mrb[0].mxu0 %v218
    %v270 = vpop.f32.mrb[0].mxu0
    %v271 = vadd.f32 %v77, %v270
    %v272 = vpop.f32.mrb[0].mxu0
    %v273 = vadd.f32 %v81, %v272
    %v274 = vpop.f32.mrb[0].mxu0
    %v275 = vpop.f32.mrb[0].mxu0
    %276 = vdwg.mxu0
    %277 = vmatprep.subr.bf16.mxu0 %v174
    %278 = vmatpush1.bf16.msra.mxu0 %v173
    %279 = vmatprep.subr.bf16.mxu0 %v179
    %280 = vmatpush1.bf16.msra.mxu0 %v178
    %281 = vmatprep.subr.bf16.mxu0 %v184
    %282 = vmatpush1.bf16.msra.mxu0 %v183
    %283 = vmatprep.subr.bf16.mxu0 %v189
    %284 = vmatpush1.bf16.msra.mxu0 %v188
    %285 = vmatprep.subr.bf16.mxu0 %v231
    %286 = vmatpush1.bf16.msra.mxu0 %v228
    %287 = vmatprep.subr.bf16.mxu0 0
    %288 = vmatpush1.bf16.msra.mxu0 0
    %289 = vmatprep.subr.bf16.mxu0 0
    %290 = vmatpush1.bf16.msra.mxu0 0
    %291 = vmatprep.subr.bf16.mxu0 0
    %292 = vmatpush1.bf16.msra.mxu0 0
    %293 = vmatprep.subr.bf16.mxu0 0
    %294 = vmatpush1.bf16.msra.mxu0 0
    %295 = vmatprep.subr.bf16.mxu0 0
    %296 = vmatpush1.bf16.msra.mxu0 0
    %297 = vmatprep.subr.bf16.mxu0 0
    %298 = vmatpush1.bf16.msra.mxu0 0
    %299 = vmatprep.subr.bf16.mxu0 0
    %300 = vmatpush1.bf16.msra.mxu0 0
    %301 = vmatprep.subr.bf16.mxu0 0
    %302 = vmatpush1.bf16.msra.mxu0 0
    %303 = vmatprep.subr.bf16.mxu0 0
    %304 = vmatpush1.bf16.msra.mxu0 0
    %305 = vmatprep.subr.bf16.mxu0 0
    %306 = vmatpush1.bf16.msra.mxu0 0
    %307 = vmatprep.subr.bf16.mxu0 0
    %308 = vmatpush1.bf16.msra.mxu0 0
    %309 = vmatprep.mubr.bf16.mxu0 0
    %310 = vmatmul.mubr.bf16.gmra.mrb[0].mxu0 %v218
    %v311 = vpop.f32.mrb[0].mxu0
    %v312 = vadd.f32 %v85, %v311
    %v313 = vpop.f32.mrb[0].mxu0
    %v314 = vadd.f32 %v89, %v313
    %v315 = vpop.f32.mrb[0].mxu0
    %v316 = vpop.f32.mrb[0].mxu0
    %317 = vdwg.mxu0
    %318 = vmatprep.subr.bf16.mxu0 0
    %319 = vmatpush1.bf16.msra.mxu0 %v175
    %320 = vmatprep.subr.bf16.mxu0 0
    %321 = vmatpush1.bf16.msra.mxu0 %v180
    %322 = vmatprep.subr.bf16.mxu0 0
    %323 = vmatpush1.bf16.msra.mxu0 %v185
    %324 = vmatprep.subr.bf16.mxu0 0
    %325 = vmatpush1.bf16.msra.mxu0 %v190
    %326 = vmatprep.subr.bf16.mxu0 0
    %327 = vmatpush1.bf16.msra.mxu0 %v234
    %328 = vmatprep.subr.bf16.mxu0 0
    %329 = vmatpush1.bf16.msra.mxu0 0
    %330 = vmatprep.subr.bf16.mxu0 0
    %331 = vmatpush1.bf16.msra.mxu0 0
    %332 = vmatprep.subr.bf16.mxu0 0
    %333 = vmatpush1.bf16.msra.mxu0 0
    %334 = vmatprep.subr.bf16.mxu0 0
    %335 = vmatpush1.bf16.msra.mxu0 0
    %336 = vmatprep.subr.bf16.mxu0 0
    %337 = vmatpush1.bf16.msra.mxu0 0
    %338 = vmatprep.subr.bf16.mxu0 0
    %339 = vmatpush1.bf16.msra.mxu0 0
    %340 = vmatprep.subr.bf16.mxu0 0
    %341 = vmatpush1.bf16.msra.mxu0 0
    %342 = vmatprep.subr.bf16.mxu0 0
    %343 = vmatpush1.bf16.msra.mxu0 0
    %344 = vmatprep.subr.bf16.mxu0 0
    %345 = vmatpush1.bf16.msra.mxu0 0
    %346 = vmatprep.subr.bf16.mxu0 0
    %347 = vmatpush1.bf16.msra.mxu0 0
    %348 = vmatprep.subr.bf16.mxu0 0
    %349 = vmatpush1.bf16.msra.mxu0 0
    %350 = vmatprep.mubr.bf16.mxu0 0
    %351 = vmatmul.mubr.bf16.gmra.mrb[0].mxu0 %v218
    %v352 = vpop.f32.mrb[0].mxu0
    %v353 = vadd.f32 %v93, %v352
    %v354 = vpop.f32.mrb[0].mxu0
    %v355 = vpop.f32.mrb[0].mxu0
    %v356 = vpop.f32.mrb[0].mxu0
    %357 = vdwg.mxu0
    %v358 = vmax.f32 %v271, 0.0
    %v359 = vmax.f32 %v273, 0.0
    %v360 = vmax.f32 %v312, 0.0
    %v361 = vmax.f32 %v314, 0.0
    %v362 = vmax.f32 %v353, 0.0
    %v363 = vld [vmem:[#allocation2 + $0xb4] sm:$0xf]
    %v364 = vld [vmem:[#allocation2 + $0xc8] sm:$0xf]
    %v365 = vld [vmem:[#allocation2 + $0xdc] sm:$0xf]
    %v366 = vld [vmem:[#allocation2 + $0xf0] sm:$0xf]
    %v367 = vld [vmem:[#allocation2 + $0x104] sm:$0xf]
    %v368 = vld [vmem:[#allocation2 + $0x118] sm:$0xf]
    %v369 = vld [vmem:[#allocation2 + $0x12c] sm:$0xf]
    %v370 = vld [vmem:[#allocation2 + $0x140] sm:$0xf]
    %v371 = vld [vmem:[#allocation2 + $0x154] sm:$0xf]
    %v372 = vld [vmem:[#allocation2 + $0x168] sm:$0xf]
    %v373 = vld [vmem:[#allocation2 + $0x17c] sm:$0xf]
    %v374 = vld [vmem:[#allocation2 + $0x190] sm:$0xf]
    %v375 = vld [vmem:[#allocation2 + $0x1a4] sm:$0xf]
    %v376 = vld [vmem:[#allocation2 + $0x1b8] sm:$0xf]
    %v377 = vld [vmem:[#allocation2 + $0x1cc] sm:$0xf]
    %v378 = vld [vmem:[#allocation2 + $0x1e0] sm:$0xf]
    %v379 = vld [vmem:[#allocation2 + $0x1f4] sm:$0xf]
    %v380 = vld [vmem:[#allocation2 + $0x208] sm:$0xf]
    %v381 = vld [vmem:[#allocation2 + $0x21c] sm:$0xf]
    %v382 = vld [vmem:[#allocation2 + $0x230] sm:$0xf]
    %v383 = vld [vmem:[#allocation2 + $0x244] sm:$0xf]
    %v384 = vld [vmem:[#allocation2 + $0x258] sm:$0xf]
    %v385 = vld [vmem:[#allocation2 + $0x26c] sm:$0xf]
    %v386 = vld [vmem:[#allocation2 + $0x280] sm:$0xf]
    %v387 = vld [vmem:[#allocation2 + $0x294] sm:$0xf]
    %v388 = vld [vmem:[#allocation2 + $0x2a8] sm:$0xf]
    %v389 = vld [vmem:[#allocation2 + $0x2bc] sm:$0xf]
    %v390 = vld [vmem:[#allocation2 + $0x2d0] sm:$0xf]
    %v391 = vld [vmem:[#allocation2 + $0x2e4] sm:$0xf]
    %v392 = vld [vmem:[#allocation2 + $0x2f8] sm:$0xf]
    %v393 = vld [vmem:[#allocation2 + $0x30c] sm:$0xf]
    %v394 = vld [vmem:[#allocation2 + $0x320] sm:$0xf]
    %v395 = vld [vmem:[#allocation2 + $0x334] sm:$0xf]
    %v396 = vld [vmem:[#allocation2 + $0x348] sm:$0xf]
    %v397 = vld [vmem:[#allocation2 + $0x35c] sm:$0xf]
    %v398 = vld [vmem:[#allocation2 + $0x370] sm:$0xf]
    %v399 = vld [vmem:[#allocation2 + $0x384] sm:$0xf]
    %v400 = vld [vmem:[#allocation2 + $0x398] sm:$0xf]
    %v401 = vld [vmem:[#allocation2 + $0x3ac] sm:$0xf]
    %v402 = vld [vmem:[#allocation2 + $0x3c0] sm:$0xf]
    %v403 = vld [vmem:[#allocation2 + $0x3d4] sm:$0xf]
    %v404 = vld [vmem:[#allocation2 + $0x3e8] sm:$0xf]
    %v405 = vld [vmem:[#allocation2 + $0x3fc] sm:$0xf]
    %v406 = vld [vmem:[#allocation2 + $0x410] sm:$0xf]
    %v407 = vld [vmem:[#allocation2 + $0x424] sm:$0xf]
    %v408 = vld [vmem:[#allocation2 + $0x438] sm:$0xf]
    %v409 = vld [vmem:[#allocation2 + $0x44c] sm:$0xf]
    %v410 = vld [vmem:[#allocation2 + $0x460] sm:$0xf]
    %v411 = vld [vmem:[#allocation2 + $0x474] sm:$0xf]
    %v412 = vld [vmem:[#allocation2 + $0x488] sm:$0xf]
    %v413 = vld [vmem:[#allocation2 + $0x49c] sm:$0xf]
    %v414 = vld [vmem:[#allocation2 + $0x4b0] sm:$0xf]
    %v415 = vld [vmem:[#allocation2 + $0x4c4] sm:$0xf]
    %v416 = vld [vmem:[#allocation2 + $0x4d8] sm:$0xf]
    %v417 = vld [vmem:[#allocation2 + $0x4ec] sm:$0xf]
    %v418 = vld [vmem:[#allocation2 + $0x500] sm:$0xf]
    %v419 = vld [vmem:[#allocation2 + $0x514] sm:$0xf]
    %v420 = vld [vmem:[#allocation2 + $0x528] sm:$0xf]
    %v421 = vld [vmem:[#allocation2 + $0x53c] sm:$0xf]
    %v422 = vld [vmem:[#allocation2 + $0x550] sm:$0xf]
    %v423 = vld [vmem:[#allocation2 + $0x564] sm:$0xf]
    %v424 = vld [vmem:[#allocation2 + $0x578] sm:$0xf]
    %v425 = vld [vmem:[#allocation2 + $0x58c] sm:$0xf]
    %v426 = vld [vmem:[#allocation2 + $0x5a0] sm:$0xf]
    %v427 = vld [vmem:[#allocation2 + $0x5b4] sm:$0xf]
    %v428 = vld [vmem:[#allocation2 + $0x5c8] sm:$0xf]
    %v429 = vld [vmem:[#allocation2 + $0x5dc] sm:$0xf]
    %v430 = vld [vmem:[#allocation2 + $0x5f0] sm:$0xf]
    %v431 = vld [vmem:[#allocation2 + $0x604] sm:$0xf]
    %v432 = vld [vmem:[#allocation2 + $0x618] sm:$0xf]
    %v433 = vld [vmem:[#allocation2 + $0x62c] sm:$0xf]
    %v434 = vld [vmem:[#allocation2 + $0x640] sm:$0xf]
    %v435 = vld [vmem:[#allocation2 + $0x654] sm:$0xf]
    %v436 = vld [vmem:[#allocation2 + $0x668] sm:$0xf]
    %v437 = vld [vmem:[#allocation2 + $0x67c] sm:$0xf]
    %v438 = vld [vmem:[#allocation2 + $0x690] sm:$0xf]
    %v439 = vld [vmem:[#allocation2 + $0x6a4] sm:$0xf]
    %v440 = vld [vmem:[#allocation2 + $0x6b8] sm:$0xf]
    %v441 = vld [vmem:[#allocation2 + $0x6cc] sm:$0xf]
    %v442 = vld [vmem:[#allocation2 + $0x6e0] sm:$0xf]
    %v443 = vpack.c.bf16 %v358, %v358
    %v444 = vpack.c.bf16 %v359, %v359
    %v445 = vpack.c.bf16 %v360, %v360
    %v446 = vpack.c.bf16 %v361, %v361
    %v447 = vpack.c.bf16 %v362, %v362
    %v448 = vld [vmem:[#allocation4 + $0x1] ss:$0 sm:$0xff]
    %v529 = vunpack.c.l.b16 %v363
    %v530 = vunpack.c.l.b16 %v364
    %v531 = vunpack.c.l.b16 %v365
    %v532 = vunpack.c.l.b16 %v366
    %v533 = vunpack.c.l.b16 %v367
    %v534 = vunpack.c.l.b16 %v368
    %v535 = vunpack.c.l.b16 %v369
    %v536 = vunpack.c.l.b16 %v370
    %v537 = vunpack.c.l.b16 %v371
    %v538 = vunpack.c.l.b16 %v372
    %v539 = vunpack.c.l.b16 %v373
    %v540 = vunpack.c.l.b16 %v374
    %v541 = vunpack.c.l.b16 %v375
    %v542 = vunpack.c.l.b16 %v376
    %v543 = vunpack.c.l.b16 %v377
    %v544 = vunpack.c.l.b16 %v378
    %v545 = vunpack.c.l.b16 %v379
    %v546 = vunpack.c.l.b16 %v380
    %v547 = vunpack.c.l.b16 %v381
    %v548 = vunpack.c.l.b16 %v382
    %v549 = vunpack.c.l.b16 %v383
    %v550 = vunpack.c.l.b16 %v384
    %v551 = vunpack.c.l.b16 %v385
    %v552 = vunpack.c.l.b16 %v386
    %v553 = vunpack.c.l.b16 %v387
    %v554 = vunpack.c.l.b16 %v388
    %v555 = vunpack.c.l.b16 %v389
    %v556 = vunpack.c.l.b16 %v390
    %v557 = vunpack.c.l.b16 %v391
    %v558 = vunpack.c.l.b16 %v392
    %v559 = vunpack.c.l.b16 %v393
    %v560 = vunpack.c.l.b16 %v394
    %v561 = vunpack.c.l.b16 %v395
    %v562 = vunpack.c.l.b16 %v396
    %v563 = vunpack.c.l.b16 %v397
    %v564 = vunpack.c.l.b16 %v398
    %v565 = vunpack.c.l.b16 %v399
    %v566 = vunpack.c.l.b16 %v400
    %v567 = vunpack.c.l.b16 %v401
    %v568 = vunpack.c.l.b16 %v402
    %v569 = vunpack.c.l.b16 %v403
    %v570 = vunpack.c.l.b16 %v404
    %v571 = vunpack.c.l.b16 %v405
    %v572 = vunpack.c.l.b16 %v406
    %v573 = vunpack.c.l.b16 %v407
    %v574 = vunpack.c.l.b16 %v408
    %v575 = vunpack.c.l.b16 %v409
    %v576 = vunpack.c.l.b16 %v410
    %v577 = vunpack.c.l.b16 %v411
    %v578 = vunpack.c.l.b16 %v412
    %v579 = vunpack.c.l.b16 %v413
    %v580 = vunpack.c.l.b16 %v414
    %v581 = vunpack.c.l.b16 %v415
    %v582 = vunpack.c.l.b16 %v416
    %v583 = vunpack.c.l.b16 %v417
    %v584 = vunpack.c.l.b16 %v418
    %v585 = vunpack.c.l.b16 %v419
    %v586 = vunpack.c.l.b16 %v420
    %v587 = vunpack.c.l.b16 %v421
    %v588 = vunpack.c.l.b16 %v422
    %v589 = vunpack.c.l.b16 %v423
    %v590 = vunpack.c.l.b16 %v424
    %v591 = vunpack.c.l.b16 %v425
    %v592 = vunpack.c.l.b16 %v426
    %v593 = vunpack.c.l.b16 %v427
    %v594 = vunpack.c.l.b16 %v428
    %v595 = vunpack.c.l.b16 %v429
    %v596 = vunpack.c.l.b16 %v430
    %v597 = vunpack.c.l.b16 %v431
    %v598 = vunpack.c.l.b16 %v432
    %v599 = vunpack.c.l.b16 %v433
    %v600 = vunpack.c.l.b16 %v434
    %v601 = vunpack.c.l.b16 %v435
    %v602 = vunpack.c.l.b16 %v436
    %v603 = vunpack.c.l.b16 %v437
    %v604 = vunpack.c.l.b16 %v438
    %v605 = vunpack.c.l.b16 %v439
    %v606 = vunpack.c.l.b16 %v440
    %v607 = vunpack.c.l.b16 %v441
    %v608 = vunpack.c.l.b16 %v442
    %v609 = vpack.c.b16 %v530, %v529
    %v610 = vpack.c.b16 %v532, %v531
    %v611 = vpack.c.b16 %v534, %v533
    %v612 = vpack.c.b16 %v536, %v535
    %v613 = vpack.c.b16 %v538, %v537
    %v614 = vpack.c.b16 %v540, %v539
    %v615 = vpack.c.b16 %v542, %v541
    %v616 = vpack.c.b16 %v544, %v543
    %v617 = vpack.c.b16 %v546, %v545
    %v618 = vpack.c.b16 %v548, %v547
    %v619 = vpack.c.b16 %v550, %v549
    %v620 = vpack.c.b16 %v552, %v551
    %v621 = vpack.c.b16 %v554, %v553
    %v622 = vpack.c.b16 %v556, %v555
    %v623 = vpack.c.b16 %v558, %v557
    %v624 = vpack.c.b16 %v560, %v559
    %v625 = vpack.c.b16 %v562, %v561
    %v626 = vpack.c.b16 %v564, %v563
    %v627 = vpack.c.b16 %v566, %v565
    %v628 = vpack.c.b16 %v568, %v567
    %v629 = vpack.c.b16 %v570, %v569
    %v630 = vpack.c.b16 %v572, %v571
    %v631 = vpack.c.b16 %v574, %v573
    %v632 = vpack.c.b16 %v576, %v575
    %v633 = vpack.c.b16 %v578, %v577
    %v634 = vpack.c.b16 %v580, %v579
    %v635 = vpack.c.b16 %v582, %v581
    %v636 = vpack.c.b16 %v584, %v583
    %v637 = vpack.c.b16 %v586, %v585
    %v638 = vpack.c.b16 %v588, %v587
    %v639 = vpack.c.b16 %v590, %v589
    %v640 = vpack.c.b16 %v592, %v591
    %v641 = vpack.c.b16 %v594, %v593
    %v642 = vpack.c.b16 %v596, %v595
    %v643 = vpack.c.b16 %v598, %v597
    %v644 = vpack.c.b16 %v600, %v599
    %v645 = vpack.c.b16 %v602, %v601
    %v646 = vpack.c.b16 %v604, %v603
    %v647 = vpack.c.b16 %v606, %v605
    %v648 = vpack.c.b16 %v608, %v607
    %689 = vmatprep.subr.bf16.mxu0 0
    %690 = vmatpush1.bf16.msra.mxu0 %v609
    %691 = vmatprep.subr.bf16.mxu0 0
    %692 = vmatpush1.bf16.msra.mxu0 %v610
    %693 = vmatprep.subr.bf16.mxu0 0
    %694 = vmatpush1.bf16.msra.mxu0 %v611
    %695 = vmatprep.subr.bf16.mxu0 0
    %696 = vmatpush1.bf16.msra.mxu0 %v612
    %697 = vmatprep.subr.bf16.mxu0 0
    %698 = vmatpush1.bf16.msra.mxu0 %v613
    %699 = vmatprep.subr.bf16.mxu0 0
    %700 = vmatpush1.bf16.msra.mxu0 %v614
    %701 = vmatprep.subr.bf16.mxu0 0
    %702 = vmatpush1.bf16.msra.mxu0 %v615
    %703 = vmatprep.subr.bf16.mxu0 0
    %704 = vmatpush1.bf16.msra.mxu0 %v616
    %705 = vmatprep.subr.bf16.mxu0 0
    %706 = vmatpush1.bf16.msra.mxu0 %v617
    %707 = vmatprep.subr.bf16.mxu0 0
    %708 = vmatpush1.bf16.msra.mxu0 %v618
    %709 = vmatprep.subr.bf16.mxu0 0
    %710 = vmatpush1.bf16.msra.mxu0 %v619
    %711 = vmatprep.subr.bf16.mxu0 0
    %712 = vmatpush1.bf16.msra.mxu0 %v620
    %713 = vmatprep.subr.bf16.mxu0 0
    %714 = vmatpush1.bf16.msra.mxu0 %v621
    %715 = vmatprep.subr.bf16.mxu0 0
    %716 = vmatpush1.bf16.msra.mxu0 %v622
    %717 = vmatprep.subr.bf16.mxu0 0
    %718 = vmatpush1.bf16.msra.mxu0 %v623
    %719 = vmatprep.subr.bf16.mxu0 0
    %720 = vmatpush1.bf16.msra.mxu0 %v624
    %721 = vmatprep.mubr.bf16.mxu0 %v444
    %722 = vmatmul.mubr.bf16.gmra.mrb[0].mxu0 %v443
    %v723 = vpop.f32.mrb[0].mxu0
    %v724 = vadd.f32 %v448, %v723
    %v725 = vpop.f32.mrb[0].mxu0
    %v726 = vpop.f32.mrb[0].mxu0
    %v727 = vpop.f32.mrb[0].mxu0
    %728 = vdwg.mxu0
    %729 = vmatprep.subr.bf16.mxu0 0
    %730 = vmatpush1.bf16.msra.mxu0 %v625
    %731 = vmatprep.subr.bf16.mxu0 0
    %732 = vmatpush1.bf16.msra.mxu0 %v626
    %733 = vmatprep.subr.bf16.mxu0 0
    %734 = vmatpush1.bf16.msra.mxu0 %v627
    %735 = vmatprep.subr.bf16.mxu0 0
    %736 = vmatpush1.bf16.msra.mxu0 %v628
    %737 = vmatprep.subr.bf16.mxu0 0
    %738 = vmatpush1.bf16.msra.mxu0 %v629
    %739 = vmatprep.subr.bf16.mxu0 0
    %740 = vmatpush1.bf16.msra.mxu0 %v630
    %741 = vmatprep.subr.bf16.mxu0 0
    %742 = vmatpush1.bf16.msra.mxu0 %v631
    %743 = vmatprep.subr.bf16.mxu0 0
    %744 = vmatpush1.bf16.msra.mxu0 %v632
    %745 = vmatprep.subr.bf16.mxu0 0
    %746 = vmatpush1.bf16.msra.mxu0 %v633
    %747 = vmatprep.subr.bf16.mxu0 0
    %748 = vmatpush1.bf16.msra.mxu0 %v634
    %749 = vmatprep.subr.bf16.mxu0 0
    %750 = vmatpush1.bf16.msra.mxu0 %v635
    %751 = vmatprep.subr.bf16.mxu0 0
    %752 = vmatpush1.bf16.msra.mxu0 %v636
    %753 = vmatprep.subr.bf16.mxu0 0
    %754 = vmatpush1.bf16.msra.mxu0 %v637
    %755 = vmatprep.subr.bf16.mxu0 0
    %756 = vmatpush1.bf16.msra.mxu0 %v638
    %757 = vmatprep.subr.bf16.mxu0 0
    %758 = vmatpush1.bf16.msra.mxu0 %v639
    %759 = vmatprep.subr.bf16.mxu0 0
    %760 = vmatpush1.bf16.msra.mxu0 %v640
    %761 = vmatprep.mubr.bf16.mxu0 %v446
    %762 = vmatmul.mubr.bf16.gmra.mrb[0].mxu0 %v445
    %v763 = vpop.f32.mrb[0].mxu0
    %v764 = vadd.f32 %v724, %v763
    %v765 = vpop.f32.mrb[0].mxu0
    %v766 = vpop.f32.mrb[0].mxu0
    %v767 = vpop.f32.mrb[0].mxu0
    %768 = vdwg.mxu0
    %769 = vmatprep.subr.bf16.mxu0 0
    %770 = vmatpush1.bf16.msra.mxu0 %v641
    %771 = vmatprep.subr.bf16.mxu0 0
    %772 = vmatpush1.bf16.msra.mxu0 %v642
    %773 = vmatprep.subr.bf16.mxu0 0
    %774 = vmatpush1.bf16.msra.mxu0 %v643
    %775 = vmatprep.subr.bf16.mxu0 0
    %776 = vmatpush1.bf16.msra.mxu0 %v644
    %777 = vmatprep.subr.bf16.mxu0 0
    %778 = vmatpush1.bf16.msra.mxu0 %v645
    %779 = vmatprep.subr.bf16.mxu0 0
    %780 = vmatpush1.bf16.msra.mxu0 %v646
    %781 = vmatprep.subr.bf16.mxu0 0
    %782 = vmatpush1.bf16.msra.mxu0 %v647
    %783 = vmatprep.subr.bf16.mxu0 0
    %784 = vmatpush1.bf16.msra.mxu0 %v648
    %785 = vmatprep.subr.bf16.mxu0 0
    %786 = vmatpush1.bf16.msra.mxu0 0
    %787 = vmatprep.subr.bf16.mxu0 0
    %788 = vmatpush1.bf16.msra.mxu0 0
    %789 = vmatprep.subr.bf16.mxu0 0
    %790 = vmatpush1.bf16.msra.mxu0 0
    %791 = vmatprep.subr.bf16.mxu0 0
    %792 = vmatpush1.bf16.msra.mxu0 0
    %793 = vmatprep.subr.bf16.mxu0 0
    %794 = vmatpush1.bf16.msra.mxu0 0
    %795 = vmatprep.subr.bf16.mxu0 0
    %796 = vmatpush1.bf16.msra.mxu0 0
    %797 = vmatprep.subr.bf16.mxu0 0
    %798 = vmatpush1.bf16.msra.mxu0 0
    %799 = vmatprep.subr.bf16.mxu0 0
    %800 = vmatpush1.bf16.msra.mxu0 0
    %801 = vmatprep.mubr.bf16.mxu0 0
    %802 = vmatmul.mubr.bf16.gmra.mrb[0].mxu0 %v447
    %v803 = vpop.f32.mrb[0].mxu0
    %v804 = vadd.f32 %v764, %v803
    %v805 = vpop.f32.mrb[0].mxu0
    %v806 = vpop.f32.mrb[0].mxu0
    %v807 = vpop.f32.mrb[0].mxu0
    %808 = vdwg.mxu0
    %v809 = vmax.f32 %v804, 0.0
    %v810 = vld [vmem:[#allocation2 + $0x6f4] sm:$0xf]
    %v811 = vld [vmem:[#allocation2 + $0x708] sm:$0xf]
    %v812 = vld [vmem:[#allocation2 + $0x71c] sm:$0xf]
    %v813 = vld [vmem:[#allocation2 + $0x730] sm:$0xf]
    %v814 = vld [vmem:[#allocation2 + $0x744] sm:$0xf]
    %v815 = vld [vmem:[#allocation2 + $0x758] sm:$0xf]
    %v816 = vld [vmem:[#allocation2 + $0x76c] sm:$0xf]
    %v817 = vld [vmem:[#allocation2 + $0x780] sm:$0xf]
    %v818 = vld [vmem:[#allocation2 + $0x794] sm:$0xf]
    %v819 = vld [vmem:[#allocation2 + $0x7a8] sm:$0xf]
    %v820 = vld [vmem:[#allocation2 + $0x7bc] sm:$0xf]
    %v821 = vld [vmem:[#allocation2 + $0x7d0] sm:$0xf]
    %v822 = vld [vmem:[#allocation2 + $0x7e4] sm:$0xf]
    %v823 = vld [vmem:[#allocation2 + $0x7f8] sm:$0xf]
    %v824 = vld [vmem:[#allocation2 + $0x80c] sm:$0xf]
    %v825 = vld [vmem:[#allocation2 + $0x820] sm:$0xf]
    %v826 = vld [vmem:[#allocation2 + $0x834] sm:$0xf]
    %v827 = vld [vmem:[#allocation2 + $0x848] sm:$0xf]
    %v828 = vld [vmem:[#allocation2 + $0x85c] sm:$0xf]
    %v829 = vld [vmem:[#allocation2 + $0x870] sm:$0xf]
    %v830 = vld [vmem:[#allocation2 + $0x884] sm:$0x3]
    %v831 = vpack.c.bf16 %v809, %v809
    %v841 = vunpack.c.l.b16 %v822
    %v842 = vunpack.c.l.b16 %v823
    %v843 = vunpack.c.l.b16 %v824
    %v844 = vunpack.c.l.b16 %v825
    %v845 = vunpack.c.l.b16 %v826
    %v846 = vunpack.c.l.b16 %v827
    %v847 = vunpack.c.l.b16 %v828
    %v848 = vunpack.c.l.b16 %v829
    %v849 = vunpack.c.l.b16 %v830
    %v850 = vpack.c.b16 %v842, %v841
    %v851 = vpack.c.b16 %v844, %v843
    %v852 = vpack.c.b16 %v846, %v845
    %v853 = vpack.c.b16 %v848, %v847
    %v854 = vpack.c.b16 %v849, %v849
    %v860 = vsel %vm220, %v854, 0
    %862 = vmatprep.subr.bf16.mxu0 0
    %863 = vmatpush1.bf16.msra.mxu0 %v850
    %864 = vmatprep.subr.bf16.mxu0 0
    %865 = vmatpush1.bf16.msra.mxu0 %v851
    %866 = vmatprep.subr.bf16.mxu0 0
    %867 = vmatpush1.bf16.msra.mxu0 %v852
    %868 = vmatprep.subr.bf16.mxu0 0
    %869 = vmatpush1.bf16.msra.mxu0 %v853
    %870 = vmatprep.subr.bf16.mxu0 0
    %871 = vmatpush1.bf16.msra.mxu0 %v860
    %872 = vmatprep.subr.bf16.mxu0 0
    %873 = vmatpush1.bf16.msra.mxu0 0
    %874 = vmatprep.subr.bf16.mxu0 0
    %875 = vmatpush1.bf16.msra.mxu0 0
    %876 = vmatprep.subr.bf16.mxu0 0
    %877 = vmatpush1.bf16.msra.mxu0 0
    %878 = vmatprep.subr.bf16.mxu0 0
    %879 = vmatpush1.bf16.msra.mxu0 0
    %880 = vmatprep.subr.bf16.mxu0 0
    %881 = vmatpush1.bf16.msra.mxu0 0
    %882 = vmatprep.subr.bf16.mxu0 0
    %883 = vmatpush1.bf16.msra.mxu0 0
    %884 = vmatprep.subr.bf16.mxu0 0
    %885 = vmatpush1.bf16.msra.mxu0 0
    %886 = vmatprep.subr.bf16.mxu0 0
    %887 = vmatpush1.bf16.msra.mxu0 0
    %888 = vmatprep.subr.bf16.mxu0 0
    %889 = vmatpush1.bf16.msra.mxu0 0
    %890 = vmatprep.subr.bf16.mxu0 0
    %891 = vmatpush1.bf16.msra.mxu0 0
    %892 = vmatprep.subr.bf16.mxu0 0
    %893 = vmatpush1.bf16.msra.mxu0 0
    %894 = vmatprep.mubr.bf16.mxu0 0
    %895 = vmatmul.mubr.bf16.gmra.mrb[0].mxu0 %v218
    %v896 = vpop.f32.mrb[0].mxu0
    %v897 = vadd.f32 0.0, %v896
    %v898 = vpop.f32.mrb[0].mxu0
    %v899 = vpop.f32.mrb[0].mxu0
    %v900 = vpop.f32.mrb[0].mxu0
    %901 = vdwg.mxu0
    %v914 = vunpack.c.l.b16 %v810
    %v915 = vunpack.c.l.b16 %v811
    %v916 = vunpack.c.l.b16 %v812
    %v917 = vunpack.c.l.b16 %v813
    %v918 = vunpack.c.l.b16 %v814
    %v919 = vunpack.c.l.b16 %v815
    %v920 = vunpack.c.l.b16 %v816
    %v921 = vunpack.c.l.b16 %v817
    %v922 = vunpack.c.l.b16 %v818
    %v923 = vunpack.c.l.b16 %v819
    %v924 = vunpack.c.l.b16 %v820
    %v925 = vunpack.c.l.b16 %v821
    %v926 = vpack.c.b16 %v915, %v914
    %v927 = vpack.c.b16 %v917, %v916
    %v928 = vpack.c.b16 %v919, %v918
    %v929 = vpack.c.b16 %v921, %v920
    %v930 = vpack.c.b16 %v923, %v922
    %v931 = vpack.c.b16 %v925, %v924
    %vm938 = vcmask 785408
    %v940 = vsel %vm938, %v831, 0
    %942 = vmatprep.subr.bf16.mxu0 0
    %943 = vmatpush1.bf16.msra.mxu0 %v926
    %944 = vmatprep.subr.bf16.mxu0 0
    %945 = vmatpush1.bf16.msra.mxu0 %v927
    %946 = vmatprep.subr.bf16.mxu0 0
    %947 = vmatpush1.bf16.msra.mxu0 %v928
    %948 = vmatprep.subr.bf16.mxu0 0
    %949 = vmatpush1.bf16.msra.mxu0 %v929
    %950 = vmatprep.subr.bf16.mxu0 0
    %951 = vmatpush1.bf16.msra.mxu0 %v930
    %952 = vmatprep.subr.bf16.mxu0 0
    %953 = vmatpush1.bf16.msra.mxu0 %v931
    %954 = vmatprep.subr.bf16.mxu0 0
    %955 = vmatpush1.bf16.msra.mxu0 0
    %956 = vmatprep.subr.bf16.mxu0 0
    %957 = vmatpush1.bf16.msra.mxu0 0
    %958 = vmatprep.subr.bf16.mxu0 0
    %959 = vmatpush1.bf16.msra.mxu0 0
    %960 = vmatprep.subr.bf16.mxu0 0
    %961 = vmatpush1.bf16.msra.mxu0 0
    %962 = vmatprep.subr.bf16.mxu0 0
    %963 = vmatpush1.bf16.msra.mxu0 0
    %964 = vmatprep.subr.bf16.mxu0 0
    %965 = vmatpush1.bf16.msra.mxu0 0
    %966 = vmatprep.subr.bf16.mxu0 0
    %967 = vmatpush1.bf16.msra.mxu0 0
    %968 = vmatprep.subr.bf16.mxu0 0
    %969 = vmatpush1.bf16.msra.mxu0 0
    %970 = vmatprep.subr.bf16.mxu0 0
    %971 = vmatpush1.bf16.msra.mxu0 0
    %972 = vmatprep.subr.bf16.mxu0 0
    %973 = vmatpush1.bf16.msra.mxu0 0
    %974 = vmatprep.mubr.bf16.mxu0 0
    %975 = vmatmul.mubr.bf16.gmra.mrb[0].mxu0 %v940
    %v976 = vpop.f32.mrb[0].mxu0
    %v977 = vadd.f32 %v897, %v976
    %v978 = vpop.f32.mrb[0].mxu0
    %v979 = vpop.f32.mrb[0].mxu0
    %v980 = vpop.f32.mrb[0].mxu0
    %981 = vdwg.mxu0
    %v982 = vld [vmem:[#allocation4 + $0x2] ss:$0 sm:$0xff]
    %v983 = vadd.f32 %v977, %v982
    %v984 = vmax.f32 %v983, 0.0
    %v985 = vld [vmem:[#allocation2 + $0x898] sm:$0xf]
    %v986 = vld [vmem:[#allocation2 + $0x8ac] sm:$0xf]
    %v987 = vld [vmem:[#allocation2 + $0x8c0] sm:$0xf]
    %v988 = vld [vmem:[#allocation2 + $0x8d4] sm:$0xf]
    %v989 = vld [vmem:[#allocation2 + $0x8e8] sm:$0xf]
    %v990 = vld [vmem:[#allocation2 + $0x8fc] sm:$0xf]
    %v991 = vld [vmem:[#allocation2 + $0x910] sm:$0xf]
    %v992 = vld [vmem:[#allocation2 + $0x924] sm:$0xf]
    %v993 = vld [vmem:[#allocation2 + $0x938] sm:$0xf]
    %v994 = vld [vmem:[#allocation2 + $0x94c] sm:$0xf]
    %v995 = vld [vmem:[#allocation2 + $0x960] sm:$0xf]
    %v996 = vld [vmem:[#allocation2 + $0x974] sm:$0xf]
    %v997 = vld [vmem:[#allocation2 + $0x988] sm:$0xf]
    %v998 = vld [vmem:[#allocation2 + $0x99c] sm:$0xf]
    %v999 = vld [vmem:[#allocation2 + $0x9b0] sm:$0xf]
    %v1000 = vld [vmem:[#allocation2 + $0x9c4] sm:$0x3]
    %v1001 = vpack.c.bf16 %v984, %v984
    %v1002 = vld [vmem:[#allocation4 + $0x3] ss:$0 sm:$0xff]
    %v1019 = vunpack.c.l.b16 %v985
    %v1020 = vunpack.c.l.b16 %v986
    %v1021 = vunpack.c.l.b16 %v987
    %v1022 = vunpack.c.l.b16 %v988
    %v1023 = vunpack.c.l.b16 %v989
    %v1024 = vunpack.c.l.b16 %v990
    %v1025 = vunpack.c.l.b16 %v991
    %v1026 = vunpack.c.l.b16 %v992
    %v1027 = vunpack.c.l.b16 %v993
    %v1028 = vunpack.c.l.b16 %v994
    %v1029 = vunpack.c.l.b16 %v995
    %v1030 = vunpack.c.l.b16 %v996
    %v1031 = vunpack.c.l.b16 %v997
    %v1032 = vunpack.c.l.b16 %v998
    %v1033 = vunpack.c.l.b16 %v999
    %v1034 = vunpack.c.l.b16 %v1000
    %v1035 = vpack.c.b16 %v1020, %v1019
    %v1036 = vpack.c.b16 %v1022, %v1021
    %v1037 = vpack.c.b16 %v1024, %v1023
    %v1038 = vpack.c.b16 %v1026, %v1025
    %v1039 = vpack.c.b16 %v1028, %v1027
    %v1040 = vpack.c.b16 %v1030, %v1029
    %v1041 = vpack.c.b16 %v1032, %v1031
    %v1042 = vpack.c.b16 %v1034, %v1033
    %vm1050 = vcmask 1014784
    %v1052 = vsel %vm1050, %v1001, 0
    %vm1054 = vcmask 1045504
    %v1056 = vsel %vm1054, %v1042, 0
    %1058 = vmatprep.subr.bf16.mxu0 0
    %1059 = vmatpush1.bf16.msra.mxu0 %v1035
    %1060 = vmatprep.subr.bf16.mxu0 0
    %1061 = vmatpush1.bf16.msra.mxu0 %v1036
    %1062 = vmatprep.subr.bf16.mxu0 0
    %1063 = vmatpush1.bf16.msra.mxu0 %v1037
    %1064 = vmatprep.subr.bf16.mxu0 0
    %1065 = vmatpush1.bf16.msra.mxu0 %v1038
    %1066 = vmatprep.subr.bf16.mxu0 0
    %1067 = vmatpush1.bf16.msra.mxu0 %v1039
    %1068 = vmatprep.subr.bf16.mxu0 0
    %1069 = vmatpush1.bf16.msra.mxu0 %v1040
    %1070 = vmatprep.subr.bf16.mxu0 0
    %1071 = vmatpush1.bf16.msra.mxu0 %v1041
    %1072 = vmatprep.subr.bf16.mxu0 0
    %1073 = vmatpush1.bf16.msra.mxu0 %v1056
    %1074 = vmatprep.subr.bf16.mxu0 0
    %1075 = vmatpush1.bf16.msra.mxu0 0
    %1076 = vmatprep.subr.bf16.mxu0 0
    %1077 = vmatpush1.bf16.msra.mxu0 0
    %1078 = vmatprep.subr.bf16.mxu0 0
    %1079 = vmatpush1.bf16.msra.mxu0 0
    %1080 = vmatprep.subr.bf16.mxu0 0
    %1081 = vmatpush1.bf16.msra.mxu0 0
    %1082 = vmatprep.subr.bf16.mxu0 0
    %1083 = vmatpush1.bf16.msra.mxu0 0
    %1084 = vmatprep.subr.bf16.mxu0 0
    %1085 = vmatpush1.bf16.msra.mxu0 0
    %1086 = vmatprep.subr.bf16.mxu0 0
    %1087 = vmatpush1.bf16.msra.mxu0 0
    %1088 = vmatprep.subr.bf16.mxu0 0
    %1089 = vmatpush1.bf16.msra.mxu0 0
    %1090 = vmatprep.mubr.bf16.mxu0 0
    %1091 = vmatmul.mubr.bf16.gmra.mrb[0].mxu0 %v1052
    %v1092 = vpop.f32.mrb[0].mxu0
    %v1093 = vadd.f32 %v1002, %v1092
    %v1094 = vpop.f32.mrb[0].mxu0
    %v1095 = vpop.f32.mrb[0].mxu0
    %v1096 = vpop.f32.mrb[0].mxu0
    %1097 = vdwg.mxu0
    %v1098 = vmax.f32 %v1093, 0.0
    %v1099 = vld [vmem:[#allocation2 + $0x9d8] sm:$0x1]
    %v1100 = vpack.c.bf16 %v1098, %v1098
    %v1101 = vld [vmem:[#allocation4 + $0x4] ss:$0 sm:$0xff]
    %vm1102 = vcmask 15360
    %v1104 = vsel %vm1102, %v1100, 0
    %vm1106 = vcmask 1040384
    %v1108 = vsel %vm1106, %v1099, 0
    %1110 = vmatprep.subr.bf16.mxu0 0
    %1111 = vmatpush1.bf16.msra.mxu0 %v1108
    %1112 = vmatprep.subr.bf16.mxu0 0
    %1113 = vmatpush1.bf16.msra.mxu0 0
    %1114 = vmatprep.subr.bf16.mxu0 0
    %1115 = vmatpush1.bf16.msra.mxu0 0
    %1116 = vmatprep.subr.bf16.mxu0 0
    %1117 = vmatpush1.bf16.msra.mxu0 0
    %1118 = vmatprep.subr.bf16.mxu0 0
    %1119 = vmatpush1.bf16.msra.mxu0 0
    %1120 = vmatprep.subr.bf16.mxu0 0
    %1121 = vmatpush1.bf16.msra.mxu0 0
    %1122 = vmatprep.subr.bf16.mxu0 0
    %1123 = vmatpush1.bf16.msra.mxu0 0
    %1124 = vmatprep.subr.bf16.mxu0 0
    %1125 = vmatpush1.bf16.msra.mxu0 0
    %1126 = vmatprep.subr.bf16.mxu0 0
    %1127 = vmatpush1.bf16.msra.mxu0 0
    %1128 = vmatprep.subr.bf16.mxu0 0
    %1129 = vmatpush1.bf16.msra.mxu0 0
    %1130 = vmatprep.subr.bf16.mxu0 0
    %1131 = vmatpush1.bf16.msra.mxu0 0
    %1132 = vmatprep.subr.bf16.mxu0 0
    %1133 = vmatpush1.bf16.msra.mxu0 0
    %1134 = vmatprep.subr.bf16.mxu0 0
    %1135 = vmatpush1.bf16.msra.mxu0 0
    %1136 = vmatprep.subr.bf16.mxu0 0
    %1137 = vmatpush1.bf16.msra.mxu0 0
    %1138 = vmatprep.subr.bf16.mxu0 0
    %1139 = vmatpush1.bf16.msra.mxu0 0
    %1140 = vmatprep.subr.bf16.mxu0 0
    %1141 = vmatpush1.bf16.msra.mxu0 0
    %1142 = vmatprep.mubr.bf16.mxu0 0
    %1143 = vmatmul.mubr.bf16.gmra.mrb[0].mxu0 %v1104
    %v1144 = vpop.f32.mrb[0].mxu0
    %v1145 = vadd.f32 %v1101, %v1144
    %v1146 = vpop.f32.mrb[0].mxu0
    %v1147 = vpop.f32.mrb[0].mxu0
    %v1148 = vpop.f32.mrb[0].mxu0
    %1149 = vdwg.mxu0
    %v1150 = vtanh.pop %v1145
    %1151 = vst [vmem:[%s3] sm:$0xff] %v1150
    // Predicated region
    $region22: #{actor_forward.1} parent=1 // pred_check
      _
    $region23: #{actor_forward.1} parent=1 // pred_check_branch
      %1153 = sbr.rel (0) target = $region25
    $region24: #{actor_forward.1} parent=1 // pred_region
      _
    $region25: #{actor_forward.1} parent=1 // pred_fallthru
      _
    // Predicated region
    $region26: #{actor_forward.1} parent=1 // pred_check
      _
    $region27: #{actor_forward.1} parent=1 // pred_check_branch
      %1155 = sbr.rel (0) target = $region29
    $region28: #{actor_forward.1} parent=1 // pred_region
      _
    $region29: #{actor_forward.1} parent=1 // pred_fallthru
      _
    %1156 = vsyncpa [#allocation3], 1
    %1157 = vsyncpa [#allocation5], 1

</llo_original>
